<compile_context>
chip_gen: v7x
topology: tpu7x:2x2x1
jax: 0.10.0
libtpu: 0.0.40
codegen_flags: <defaults>
</compile_context>

<pallas_src>
import numpy as np
import jax
import jax.numpy as jnp
from jax.experimental import pallas as pl
from jax.experimental.pallas import tpu as pltpu


def _fused_ctnet_head_kernel(x_ref, w1t_ref, b1_ref, w2t_ref, b2_ref, o_ref):
    # x_ref  : (9*Cin, tile_hw)   im2col columns, HW lane-dense
    # w1t_ref: (H_total, 9*Cin)   3x3 conv weights of ALL heads (transposed)
    # b1_ref : (H_total, 1)
    # w2t_ref: (C_total, H_total) block-diagonal 1x1 conv weights (transposed)
    # b2_ref : (C_total, 1)
    # o_ref  : (C_total, tile_hw) output block, HW lane-dense
    h = jnp.dot(w1t_ref[...], x_ref[...], preferred_element_type=jnp.float32)
    h = jnp.maximum(h + b1_ref[...], 0.0)
    out = jnp.dot(w2t_ref[...], h, preferred_element_type=jnp.float32) + b2_ref[...]
    o_ref[...] = out.astype(o_ref.dtype)


def _pick_hw_tile(hw):
    """Largest HW tile that divides HW and keeps lane-dense 128-multiple blocks."""
    for t in (2048, 1024, 512, 256, 128):
        if hw % t == 0:
            return t
    return hw  # fall back to the full (untiled) extent


def ctnet_head_fused_forward(x_nchw, w1t_all, b1_all, w2t_all, b2_all):
    """Run all heads fused; returns (N, C_total, H, W) float32."""
    N, Cin, H, W = x_nchw.shape
    HW = H * W
    K1 = 9 * Cin
    H_total = w1t_all.shape[0]
    C_total = w2t_all.shape[0]

    # im2col, transposed so HW sits in the lane dim: (N, 9*Cin, HW).
    # Built ONCE and shared by every head (heads are fused below).
    xp = jnp.pad(x_nchw, ((0, 0), (0, 0), (1, 1), (1, 1)))
    taps = [xp[:, :, ky:ky + H, kx:kx + W].reshape(N, Cin, HW)
            for ky in range(3) for kx in range(3)]
    x_col = jnp.stack(taps, axis=1).reshape(N, K1, HW)

    tile = _pick_hw_tile(HW)
    grid = (N, HW // tile)

    cost = pl.CostEstimate(
        flops=2 * N * HW * (K1 * H_total + H_total * C_total),
        transcendentals=0,
        bytes_accessed=4 * (N * K1 * HW + H_total * (K1 + 1)
                            + C_total * (H_total + 1) + N * C_total * HW),
    )

    out = pl.pallas_call(
        _fused_ctnet_head_kernel,
        out_shape=jax.ShapeDtypeStruct((N, C_total, HW), jnp.float32),
        grid_spec=pltpu.PrefetchScalarGridSpec(
            num_scalar_prefetch=0,
            grid=grid,
            in_specs=[
                # batch dim squeezed out of the kernel view
                pl.BlockSpec((None, K1, tile), lambda b, t: (b, 0, t)),
                pl.BlockSpec((H_total, K1), lambda b, t: (0, 0)),
                pl.BlockSpec((H_total, 1), lambda b, t: (0, 0)),
                pl.BlockSpec((C_total, H_total), lambda b, t: (0, 0)),
                pl.BlockSpec((C_total, 1), lambda b, t: (0, 0)),
            ],
            out_specs=pl.BlockSpec((None, C_total, tile), lambda b, t: (b, 0, t)),
        ),
        compiler_params=pltpu.CompilerParams(
            dimension_semantics=("parallel", "parallel")),
        cost_estimate=cost,
    )(x_col, w1t_all, b1_all, w2t_all, b2_all)

    # (N, C_total, HW) -> (N, C_total, H, W): pure reshape, no transpose needed.
    return out.reshape(N, C_total, H, W)


class CtnetHeadPallas:
    """JAX/Pallas re-implementation of CtnetHead (head_conv>0, final_kernel=1)."""

    def __init__(self, heads, channels_in, head_conv=32, final_kernel=1, key=None):
        assert final_kernel == 1, "only final_kernel=1 implemented"
        assert head_conv > 0
        self.heads = dict(heads)
        self.channels_in = channels_in
        self.head_conv = head_conv
        if key is None:
            key = jax.random.PRNGKey(42)

        n_heads = len(self.heads)
        C_total = sum(self.heads.values())
        H_total = n_heads * head_conv
        K1 = 9 * channels_in

        self.per_head = {}
        self.class_slices = {}
        w1t_blocks, b1_blocks = [], []
        w2t_all = np.zeros((C_total, H_total), np.float32)
        b2_all = np.zeros((C_total,), np.float32)

        c_off = 0
        h_off = 0
        for head, classes in self.heads.items():
            key, k1, k2, k3 = jax.random.split(key, 4)
            # PyTorch OIHW weights, deterministic synthetic init.
            w1_oihw = 0.1 * jax.random.normal(
                k1, (head_conv, channels_in, 3, 3), jnp.float32)
            w2_oihw = 0.1 * jax.random.normal(
                k2, (classes, head_conv, 1, 1), jnp.float32)
            if 'hm' in head:
                # fc[-1].bias.data.fill_(-2.19); first conv bias keeps its init.
                b1 = 0.05 * jax.random.normal(k3, (head_conv,), jnp.float32)
                b2 = jnp.full((classes,), -2.19, jnp.float32)
            else:
                # fill_fc_weights: every Conv2d bias -> 0
                b1 = jnp.zeros((head_conv,), jnp.float32)
                b2 = jnp.zeros((classes,), jnp.float32)

            # Fused kernel layouts.
            #   OIHW (HC, Cin, 3, 3) -> (3, 3, Cin, HC) -> (9*Cin, HC) -> (HC, 9*Cin)
            #   K index = (ky*3 + kx)*Cin + c, matching the im2col tap order.
            w1t = jnp.transpose(w1_oihw, (2, 3, 1, 0)).reshape(K1, head_conv).T
            w1t_blocks.append(w1t)
            b1_blocks.append(b1)
            # Block-diagonal 1x1 weights: (C_total, H_total)
            w2t_all[c_off:c_off + classes, h_off:h_off + head_conv] = \
                np.asarray(w2_oihw[:, :, 0, 0])
            b2_all[c_off:c_off + classes] = np.asarray(b2)

            self.per_head[head] = dict(w1_oihw=w1_oihw, b1=b1,
                                       w2_oihw=w2_oihw, b2=b2)
            self.class_slices[head] = (c_off, classes)
            c_off += classes
            h_off += head_conv

        self.w1t_all = jnp.concatenate(w1t_blocks, axis=0)            # (H_total, 9*Cin)
        self.b1_all = jnp.concatenate(b1_blocks, axis=0).reshape(H_total, 1)
        self.w2t_all = jnp.asarray(w2t_all)                           # (C_total, H_total)
        self.b2_all = jnp.asarray(b2_all).reshape(C_total, 1)

    def __call__(self, x):
        if isinstance(x, (list, tuple)):
            x = x[0]
        out = ctnet_head_fused_forward(
            x, self.w1t_all, self.b1_all, self.w2t_all, self.b2_all)
        z = {}
        for head, (c_off, classes) in self.class_slices.items():
            z[head] = out[:, c_off:c_off + classes]
        return z

    def reference(self, x):
        """Pure-JAX (XLA conv) reference of the PyTorch forward."""
        if isinstance(x, (list, tuple)):
            x = x[0]
        z = {}
        dn = ('NCHW', 'OIHW', 'NCHW')
        for head in self.heads:
            p = self.per_head[head]
            y = jax.lax.conv_general_dilated(
                x, p['w1_oihw'], (1, 1), 'SAME', dimension_numbers=dn)
            y = jnp.maximum(y + p['b1'][None, :, None, None], 0.0)
            y = jax.lax.conv_general_dilated(
                y, p['w2_oihw'], (1, 1), 'SAME', dimension_numbers=dn)
            z[head] = y + p['b2'][None, :, None, None]
        return z


if __name__ == "__main__":
    # Small shapes consistent with the module: NCHW input, two heads.
    N, Cin, H, W = 2, 4, 16, 16
    heads = {'hm': 2, 'reg': 2}
    head_conv = 32

    x = jax.random.normal(jax.random.PRNGKey(0), (N, Cin, H, W), jnp.float32)

    module = CtnetHeadPallas(heads, channels_in=Cin, head_conv=head_conv,
                             final_kernel=1, key=jax.random.PRNGKey(1))

    out = module(x)
    out = jax.tree_util.tree_map(jax.block_until_ready, out)

    ref = module.reference(x)
    for head in heads:
        assert out[head].shape == (N, heads[head], H, W), out[head].shape
        np.testing.assert_allclose(np.asarray(out[head]), np.asarray(ref[head]),
                                   atol=1e-2, rtol=1e-2)

    print("KERNEL_OK")
</pallas_src>

<mosaic_0001>
module attributes {stable_mosaic.version = 11 : i64} {
  func.func @_fused_ctnet_head_kernel(%arg0: i32, %arg1: i32, %arg2: memref<1x36x256xf32, #tpu.memory_space<vmem>>, %arg3: memref<64x36xf32, #tpu.memory_space<vmem>>, %arg4: memref<64x1xf32, #tpu.memory_space<vmem>>, %arg5: memref<4x64xf32, #tpu.memory_space<vmem>>, %arg6: memref<4x1xf32, #tpu.memory_space<vmem>>, %arg7: memref<1x4x256xf32, #tpu.memory_space<vmem>>) attributes {dimension_semantics = [#tpu.dimension_semantics<parallel>, #tpu.dimension_semantics<parallel>], iteration_bounds = array<i64: 2, 1>, scalar_prefetch = 0 : i64, scratch_operands = 0 : i64, tpu.core_type = #tpu.core_type<tc>, window_params = [{transform_indices = @transform_0, window_bounds = array<i64: 1, 36, 256>}, {pipeline_mode = #tpu.pipeline_mode<synchronous>, transform_indices = @transform_1, window_bounds = array<i64: 64, 36>}, {pipeline_mode = #tpu.pipeline_mode<synchronous>, transform_indices = @transform_2, window_bounds = array<i64: 64, 1>}, {pipeline_mode = #tpu.pipeline_mode<synchronous>, transform_indices = @transform_3, window_bounds = array<i64: 4, 64>}, {pipeline_mode = #tpu.pipeline_mode<synchronous>, transform_indices = @transform_4, window_bounds = array<i64: 4, 1>}, {transform_indices = @transform_5, window_bounds = array<i64: 1, 4, 256>}]} {
    %c0 = arith.constant 0 : index
    %c0_0 = arith.constant 0 : index
    %0 = vector.load %arg3[%c0, %c0_0] : memref<64x36xf32, #tpu.memory_space<vmem>>, vector<64x36xf32>
    %c0_1 = arith.constant 0 : index
    %c0_2 = arith.constant 0 : index
    %c0_3 = arith.constant 0 : index
    %1 = vector.load %arg2[%c0_1, %c0_2, %c0_3] : memref<1x36x256xf32, #tpu.memory_space<vmem>>, vector<1x36x256xf32>
    %2 = vector.shape_cast %1 : vector<1x36x256xf32> to vector<36x256xf32>
    %cst = arith.constant dense<0.000000e+00> : vector<64x256xf32>
    %3 = tpu.matmul %0, %2, %cst {dimension_numbers = #tpu.dot_dimension_numbers<[1], [0], [0], [1], [0, 0, 1, 1], [], []>} : vector<64x36xf32>, vector<36x256xf32>, vector<64x256xf32> -> vector<64x256xf32>
    %c0_4 = arith.constant 0 : index
    %c0_5 = arith.constant 0 : index
    %4 = vector.load %arg4[%c0_4, %c0_5] : memref<64x1xf32, #tpu.memory_space<vmem>>, vector<64x1xf32>
    %5 = vector.broadcast %4 : vector<64x1xf32> to vector<64x256xf32>
    %6 = arith.addf %3, %5 : vector<64x256xf32>
    %cst_6 = arith.constant 0.000000e+00 : f32
    %7 = vector.broadcast %cst_6 : f32 to vector<64x256xf32>
    %8 = arith.maximumf %6, %7 : vector<64x256xf32>
    %c0_7 = arith.constant 0 : index
    %c0_8 = arith.constant 0 : index
    %9 = vector.load %arg5[%c0_7, %c0_8] : memref<4x64xf32, #tpu.memory_space<vmem>>, vector<4x64xf32>
    %cst_9 = arith.constant dense<0.000000e+00> : vector<4x256xf32>
    %10 = tpu.matmul %9, %8, %cst_9 {dimension_numbers = #tpu.dot_dimension_numbers<[1], [0], [0], [1], [0, 0, 1, 1], [], []>} : vector<4x64xf32>, vector<64x256xf32>, vector<4x256xf32> -> vector<4x256xf32>
    %c0_10 = arith.constant 0 : index
    %c0_11 = arith.constant 0 : index
    %11 = vector.load %arg6[%c0_10, %c0_11] : memref<4x1xf32, #tpu.memory_space<vmem>>, vector<4x1xf32>
    %12 = vector.broadcast %11 : vector<4x1xf32> to vector<4x256xf32>
    %13 = arith.addf %10, %12 : vector<4x256xf32>
    %c0_12 = arith.constant 0 : index
    %c0_13 = arith.constant 0 : index
    %c0_14 = arith.constant 0 : index
    %14 = vector.load %arg7[%c0_12, %c0_13, %c0_14] : memref<1x4x256xf32, #tpu.memory_space<vmem>>, vector<1x4x256xf32>
    %15 = vector.shape_cast %14 : vector<1x4x256xf32> to vector<4x256xf32>
    %16 = vector.shape_cast %13 : vector<4x256xf32> to vector<1x4x256xf32>
    tpu.vector_store %arg7[%c0_12, %c0_13, %c0_14], %16 {strides = array<i32>} : memref<1x4x256xf32, #tpu.memory_space<vmem>>, vector<1x4x256xf32>,
    return
  }
  func.func @transform_0(%arg0: i32, %arg1: i32) -> (i32, i32, i32) {
    %c0_i32 = arith.constant 0 : i32
    %c0_i32_0 = arith.constant 0 : i32
    return %arg0, %c0_i32, %arg1 : i32, i32, i32
  }
  func.func @transform_1(%arg0: i32, %arg1: i32) -> (i32, i32) {
    %c0_i32 = arith.constant 0 : i32
    %c0_i32_0 = arith.constant 0 : i32
    %c0_i32_1 = arith.constant 0 : i32
    return %c0_i32, %c0_i32_0 : i32, i32
  }
  func.func @transform_2(%arg0: i32, %arg1: i32) -> (i32, i32) {
    %c0_i32 = arith.constant 0 : i32
    %c0_i32_0 = arith.constant 0 : i32
    %c0_i32_1 = arith.constant 0 : i32
    return %c0_i32, %c0_i32_0 : i32, i32
  }
  func.func @transform_3(%arg0: i32, %arg1: i32) -> (i32, i32) {
    %c0_i32 = arith.constant 0 : i32
    %c0_i32_0 = arith.constant 0 : i32
    %c0_i32_1 = arith.constant 0 : i32
    return %c0_i32, %c0_i32_0 : i32, i32
  }
  func.func @transform_4(%arg0: i32, %arg1: i32) -> (i32, i32) {
    %c0_i32 = arith.constant 0 : i32
    %c0_i32_0 = arith.constant 0 : i32
    %c0_i32_1 = arith.constant 0 : i32
    return %c0_i32, %c0_i32_0 : i32, i32
  }
  func.func @transform_5(%arg0: i32, %arg1: i32) -> (i32, i32, i32) {
    %c0_i32 = arith.constant 0 : i32
    %c0_i32_0 = arith.constant 0 : i32
    return %arg0, %c0_i32, %arg1 : i32, i32, i32
  }
}

</mosaic_0001>

<llo_original>
// kernel: tpu_custom_call.1
$region0: #{tpu_custom_call.1}
  #allocation0 [shape = 'u32[]', space=smem, size = 0x4, offset = 0x4, fixed_abs, tag = 'smem constant byte address 0x4 - core index']
  #allocation1 [shape = 'u32[144,128]{1,0:T(1,128)}', space=vmem, size = 0x12000, scoped, tag = 'internal scratch']
  %s0 = inlined_call_operand.vmem [shape: f32[2,36,256], index: 0, kind: input, shape index: {}]
  %s1 = inlined_call_operand.vmem [shape: f32[64,36], index: 1, kind: input, shape index: {}]
  %s2 = inlined_call_operand.vmem [shape: f32[64,1], index: 2, kind: input, shape index: {}]
  %s3 = inlined_call_operand.vmem [shape: f32[4,64], index: 3, kind: input, shape index: {}]
  %s4 = inlined_call_operand.vmem [shape: f32[4,1], index: 4, kind: input, shape index: {}]
  %s5 = inlined_call_operand.hbm [shape: f32[2,4,256], index: 5, kind: output, shape index: {}]
  %s6 = sld [smem:[#allocation0]]
  $region53: #{tpu_custom_call.1} parent=0
    _
  %s8 = ssub.s32 1, %s6
  %s9 = scalar_select 0, %s8, %s6
  $region1: #{tpu_custom_call.1} parent=0
    #allocation2 [shape = 'u8[8192]{0}', space=vmem, size = 0x2000, scoped, tag = 'output window, operand 0']
    #allocation3 [shape = 's32[2]{0}', space=sflag, size = 0x8, scoped, tag = 'scoped memory for tpu_custom_call.1']
    %10 = vsyncpa [#allocation3], 0
    %s11 = scalar_lea.sflag [#allocation3], 1
    %12 = vsyncpa %s11, 0
    loop: start=0, step=1, limit=4
    $region2: #{tpu_custom_call.1} parent=1 // loop_pre_header
      _
    $region3: #{tpu_custom_call.1} parent=1 // loop_header
      %s14 = sphi 0, %s18
      %p15 = scmp.ge.s32.totalorder %s14, 4
      %s21 = sphi 0, %s33
      %s22 = sphi 0, %s29
      %s23 = sphi 0, %s21
      %s24 = sphi 0, %s22
      %s25 = sphi 0, %s23
      %s26 = sphi 0, %s24
      %s38 = sphi 0, %s40
      %s41 = sphi 0, %s38
      %s42 = sphi 0, %s41
      %s58 = sphi 0, %s42
      %s62 = sphi 0, %s62
      %s64 = sphi 0, %s62
      %s65 = sphi 0, %s64
      %s79 = sphi 0, %s65
      %s83 = sphi 0, %s83
      %s85 = sphi 0, %s83
      %s86 = sphi 0, %s85
      %s100 = sphi 0, %s86
      %s104 = sphi 0, %s104
      %s106 = sphi 0, %s104
      %s107 = sphi 0, %s106
      %s121 = sphi 0, %s107
      %s125 = sphi 0, %s125
      %s127 = sphi 0, %s125
      %s128 = sphi 0, %s127
      %s142 = sphi 0, %s128
      %s150 = sphi 0, %s152
      %s153 = sphi 0, %s150
      %s154 = sphi 0, %s153
      %s170 = sphi 0, %s154
    $region4: #{tpu_custom_call.1} parent=1 // loop_header_branch
      %17 = sbr.rel (%p15) target = $region8
    $region5: #{tpu_custom_call.1} parent=1 // loop_body
      %s19 = ssub.s32 %s14, 1
      %s20 = ssub.s32 %s14, 2
      %s27 = sadd.s32 1, %s22
      %p28 = scmp.ge.s32.totalorder %s27, 1
      %s29 = scalar_select %p28, 0, %s27
      %s30 = sadd.s32 1, %s21
      %s31 = scalar_select %p28, %s30, %s21
      %p32 = scmp.ge.s32.totalorder %s31, 2
      %s33 = scalar_select %p32, 0, %s31
      %s34 = ssub.s32 %s21, %s33
      %s35 = ssub.s32 %s22, %s29
      %s36 = sor.u32 %s34, %s35
      %p37 = scmp.eq.s32.totalorder %s36, 0
      %s39 = sadd.s32 %s38, 1
      %s40 = scalar_select %p37, %s38, %s39
      %p43 = pneg %p37
      %p44 = scmp.eq.s32.totalorder %s14, 1
      %p45 = por %p43, %p44
      %p46 = scmp.ne.s32.totalorder %s38, %s41
      %p47 = scmp.eq.s32.totalorder %s14, 0
      %p48 = por %p46, %p47
      %p49 = scmp.ne.s32.totalorder %s38, %s41
      %p50 = scmp.eq.s32.totalorder %s19, 1
      %p51 = por %p49, %p50
      %p52 = scmp.ne.s32.totalorder %s41, %s42
      %p53 = scmp.eq.s32.totalorder %s19, 0
      %p54 = por %p52, %p53
      %p55 = scmp.ne.s32.totalorder %s41, %s42
      %p56 = scmp.eq.s32.totalorder %s20, 1
      %p57 = por %p55, %p56
      %p59 = scmp.ne.s32.totalorder %s42, %s58
      %p60 = scmp.eq.s32.totalorder %s20, 0
      %p61 = por %p59, %p60
      %s63 = sadd.s32 %s62, 1
      %p66 = scmp.eq.s32.totalorder %s14, 1
      %p67 = scmp.ne.s32.totalorder %s62, %s64
      %p68 = scmp.eq.s32.totalorder %s14, 0
      %p69 = por %p67, %p68
      %p70 = scmp.ne.s32.totalorder %s62, %s64
      %p71 = scmp.eq.s32.totalorder %s19, 1
      %p72 = por %p70, %p71
      %p73 = scmp.ne.s32.totalorder %s64, %s65
      %p74 = scmp.eq.s32.totalorder %s19, 0
      %p75 = por %p73, %p74
      %p76 = scmp.ne.s32.totalorder %s64, %s65
      %p77 = scmp.eq.s32.totalorder %s20, 1
      %p78 = por %p76, %p77
      %p80 = scmp.ne.s32.totalorder %s65, %s79
      %p81 = scmp.eq.s32.totalorder %s20, 0
      %p82 = por %p80, %p81
      %s84 = sadd.s32 %s83, 1
      %p87 = scmp.eq.s32.totalorder %s14, 1
      %p88 = scmp.ne.s32.totalorder %s83, %s85
      %p89 = scmp.eq.s32.totalorder %s14, 0
      %p90 = por %p88, %p89
      %p91 = scmp.ne.s32.totalorder %s83, %s85
      %p92 = scmp.eq.s32.totalorder %s19, 1
      %p93 = por %p91, %p92
      %p94 = scmp.ne.s32.totalorder %s85, %s86
      %p95 = scmp.eq.s32.totalorder %s19, 0
      %p96 = por %p94, %p95
      %p97 = scmp.ne.s32.totalorder %s85, %s86
      %p98 = scmp.eq.s32.totalorder %s20, 1
      %p99 = por %p97, %p98
      %p101 = scmp.ne.s32.totalorder %s86, %s100
      %p102 = scmp.eq.s32.totalorder %s20, 0
      %p103 = por %p101, %p102
      %s105 = sadd.s32 %s104, 1
      %p108 = scmp.eq.s32.totalorder %s14, 1
      %p109 = scmp.ne.s32.totalorder %s104, %s106
      %p110 = scmp.eq.s32.totalorder %s14, 0
      %p111 = por %p109, %p110
      %p112 = scmp.ne.s32.totalorder %s104, %s106
      %p113 = scmp.eq.s32.totalorder %s19, 1
      %p114 = por %p112, %p113
      %p115 = scmp.ne.s32.totalorder %s106, %s107
      %p116 = scmp.eq.s32.totalorder %s19, 0
      %p117 = por %p115, %p116
      %p118 = scmp.ne.s32.totalorder %s106, %s107
      %p119 = scmp.eq.s32.totalorder %s20, 1
      %p120 = por %p118, %p119
      %p122 = scmp.ne.s32.totalorder %s107, %s121
      %p123 = scmp.eq.s32.totalorder %s20, 0
      %p124 = por %p122, %p123
      %s126 = sadd.s32 %s125, 1
      %p129 = scmp.eq.s32.totalorder %s14, 1
      %p130 = scmp.ne.s32.totalorder %s125, %s127
      %p131 = scmp.eq.s32.totalorder %s14, 0
      %p132 = por %p130, %p131
      %p133 = scmp.ne.s32.totalorder %s125, %s127
      %p134 = scmp.eq.s32.totalorder %s19, 1
      %p135 = por %p133, %p134
      %p136 = scmp.ne.s32.totalorder %s127, %s128
      %p137 = scmp.eq.s32.totalorder %s19, 0
      %p138 = por %p136, %p137
      %p139 = scmp.ne.s32.totalorder %s127, %s128
      %p140 = scmp.eq.s32.totalorder %s20, 1
      %p141 = por %p139, %p140
      %p143 = scmp.ne.s32.totalorder %s128, %s142
      %p144 = scmp.eq.s32.totalorder %s20, 0
      %p145 = por %p143, %p144
      %s146 = ssub.s32 %s21, %s33
      %s147 = ssub.s32 %s22, %s29
      %s148 = sor.u32 %s146, %s147
      %p149 = scmp.eq.s32.totalorder %s148, 0
      %s151 = sadd.s32 %s150, 1
      %s152 = scalar_select %p149, %s150, %s151
      %p155 = pneg %p149
      %p156 = scmp.eq.s32.totalorder %s14, 1
      %p157 = por %p155, %p156
      %p158 = scmp.ne.s32.totalorder %s150, %s153
      %p159 = scmp.eq.s32.totalorder %s14, 0
      %p160 = por %p158, %p159
      %p161 = scmp.ne.s32.totalorder %s150, %s153
      %p162 = scmp.eq.s32.totalorder %s19, 1
      %p163 = por %p161, %p162
      %p164 = scmp.ne.s32.totalorder %s153, %s154
      %p165 = scmp.eq.s32.totalorder %s19, 0
      %p166 = por %p164, %p165
      %p167 = scmp.ne.s32.totalorder %s153, %s154
      %p168 = scmp.eq.s32.totalorder %s20, 1
      %p169 = por %p167, %p168
      %p171 = scmp.ne.s32.totalorder %s154, %s170
      %p172 = scmp.eq.s32.totalorder %s20, 0
      %p173 = por %p171, %p172
      %p174 = scmp.le.s32.totalorder 1, %s14
      %p175 = scmp.lt.s32.totalorder %s14, 3
      %p176 = pnand %p174, %p175
      %p177 = pneg %p176
      // Predicated region
      $region9: #{tpu_custom_call.1} parent=5 // pred_check
        _
      $region10: #{tpu_custom_call.1} parent=5 // pred_check_branch
        %179 = sbr.rel (%p176) target = $region12
      $region11: #{tpu_custom_call.1} parent=5 // pred_region
        %s180 = ssub.s32 %s14, 1
        // Predicated region
        $region13: #{tpu_custom_call.1} parent=11 // pred_check
          %p181 = pneg %p75
        $region14: #{tpu_custom_call.1} parent=11 // pred_check_branch
          %183 = sbr.rel (%p181) target = $region16
        $region15: #{tpu_custom_call.1} parent=11 // pred_region
          _
        $region16: #{tpu_custom_call.1} parent=11 // pred_fallthru
          _
        // Predicated region
        $region17: #{tpu_custom_call.1} parent=11 // pred_check
          %p184 = pneg %p96
        $region18: #{tpu_custom_call.1} parent=11 // pred_check_branch
          %186 = sbr.rel (%p184) target = $region20
        $region19: #{tpu_custom_call.1} parent=11 // pred_region
          _
        $region20: #{tpu_custom_call.1} parent=11 // pred_fallthru
          _
        // Predicated region
        $region21: #{tpu_custom_call.1} parent=11 // pred_check
          %p187 = pneg %p117
        $region22: #{tpu_custom_call.1} parent=11 // pred_check_branch
          %189 = sbr.rel (%p187) target = $region24
        $region23: #{tpu_custom_call.1} parent=11 // pred_region
          _
        $region24: #{tpu_custom_call.1} parent=11 // pred_fallthru
          _
        // Predicated region
        $region25: #{tpu_custom_call.1} parent=11 // pred_check
          %p190 = pneg %p138
        $region26: #{tpu_custom_call.1} parent=11 // pred_check_branch
          %192 = sbr.rel (%p190) target = $region28
        $region27: #{tpu_custom_call.1} parent=11 // pred_region
          _
        $region28: #{tpu_custom_call.1} parent=11 // pred_fallthru
          _
      $region12: #{tpu_custom_call.1} parent=5 // pred_fallthru
        _
      %p193 = scmp.lt.s32.totalorder %s14, 2
      // Predicated region
      $region29: #{tpu_custom_call.1} parent=5 // pred_check
        %p194 = pneg %p193
      $region30: #{tpu_custom_call.1} parent=5 // pred_check_branch
        %196 = sbr.rel (%p194) target = $region32
      $region31: #{tpu_custom_call.1} parent=5 // pred_region
        // Predicated region
        $region33: #{tpu_custom_call.1} parent=31 // pred_check
          %p197 = pneg %p48
        $region34: #{tpu_custom_call.1} parent=31 // pred_check_branch
          %199 = sbr.rel (%p197) target = $region36
        $region35: #{tpu_custom_call.1} parent=31 // pred_region
          %s200 = smul.u32 2, %s22
          %p201 = scmp.lt.s32.totalorder %s21, 1
          %s202 = scalar_select %p201, %s21, 1
          %p203 = scmp.lt.s32.totalorder %s200, 1
          %s204 = scalar_select %p203, %s200, 1
          %s205 = smul.addr %s202, 10
          %s206 = sadd.s32 %s204, %s205
          %s207 = smul.addr %s206, 8
          %s208 = scalar_lea.vmem %s0, %s207
          %s209 = smul.u32 2, %s22
        $region36: #{tpu_custom_call.1} parent=31 // pred_fallthru
          _
      $region32: #{tpu_custom_call.1} parent=5 // pred_fallthru
        _
      %p210 = scmp.le.s32.totalorder 1, %s14
      %p211 = scmp.lt.s32.totalorder %s14, 3
      %p212 = pnand %p210, %p211
      %p213 = pneg %p212
      // Predicated region
      $region37: #{tpu_custom_call.1} parent=5 // pred_check
        _
      $region38: #{tpu_custom_call.1} parent=5 // pred_check_branch
        %215 = sbr.rel (%p212) target = $region40
      $region39: #{tpu_custom_call.1} parent=5 // pred_region
        %s216 = ssub.s32 %s14, 1
        %s217 = smul.u32 2, %s24
        %p218 = scmp.lt.s32.totalorder %s23, 1
        %s219 = scalar_select %p218, %s23, 1
        %p220 = scmp.lt.s32.totalorder %s217, 1
        %s221 = scalar_select %p220, %s217, 1
        %s222 = smul.addr %s219, 10
        %s223 = sadd.s32 %s221, %s222
        %s224 = smul.addr %s223, 8
        %s225 = scalar_lea.vmem %s0, %s224
        %p226 = pneg %p54
        %p227 = pneg %p51
        %p228 = pneg %p75
        %p229 = pneg %p72
        %p230 = pneg %p96
        %p231 = pneg %p93
        %p232 = pneg %p117
        %p233 = pneg %p114
        %p234 = pneg %p138
        %p235 = pneg %p135
        %p236 = pneg %p166
        %p237 = pneg %p163
        %s238 = sand.u32 %s153, 1
        %s239 = scalar_lea.sflag [#allocation3], %s238
        %s240 = sand.u32 %s153, 1
        %s241 = smul.addr %s240, 8
        %s242 = scalar_lea.vmem [#allocation2], %s241
        %s243 = smul.u32 2, %s24
        %p244 = scmp.lt.s32.totalorder %s23, 1
        %s245 = scalar_select %p244, %s23, 1
        %p246 = scmp.lt.s32.totalorder %s243, 1
        %s247 = scalar_select %p246, %s243, 1
        %s248 = smul.addr %s245, 10
        %s249 = sadd.s32 %s247, %s248
        %s250 = smul.addr %s249, 8
        %s251 = scalar_lea.vmem %s0, %s250
        %s252 = smul.u32 2, %s24
        %s253 = smul.u32 2, %s24
        %v254 = vld [vmem:[%s1] sm:$0xff]
        %v255 = vld [vmem:[%s1 + $0x8] sm:$0xff]
        %v256 = vld [vmem:[%s1 + $0x10] sm:$0xff]
        %v257 = vld [vmem:[%s1 + $0x18] sm:$0xff]
        %v258 = vld [vmem:[%s1 + $0x20] sm:$0xff]
        %v259 = vld [vmem:[%s1 + $0x28] sm:$0xff]
        %v260 = vld [vmem:[%s1 + $0x30] sm:$0xff]
        %v261 = vld [vmem:[%s1 + $0x38] sm:$0xff]
        %v262 = vld [vmem:[%s251] sm:$0xff]
        %v263 = vld [vmem:[%s251 + $0x8] sm:$0xff]
        %v264 = vld [vmem:[%s251 + $0x10] sm:$0xff]
        %v265 = vld [vmem:[%s251 + $0x18] sm:$0xff]
        %v266 = vld [vmem:[%s251 + $0x20] sm:$0xff]
        %v267 = vld [vmem:[%s251 + $0x28] sm:$0xff]
        %v268 = vld [vmem:[%s251 + $0x30] sm:$0xff]
        %v269 = vld [vmem:[%s251 + $0x38] sm:$0xff]
        %v270 = vld [vmem:[%s251 + $0x40] sm:$0xf]
        %v271 = vld [vmem:[%s251 + $0x48] sm:$0xf]
        %v272 = vld [vmem:[%s2] sm:$0xff]
        %v273 = vld [vmem:[%s2 + $0x8] sm:$0xff]
        %v274 = vld [vmem:[%s2 + $0x10] sm:$0xff]
        %v275 = vld [vmem:[%s2 + $0x18] sm:$0xff]
        %v276 = vld [vmem:[%s2 + $0x20] sm:$0xff]
        %v277 = vld [vmem:[%s2 + $0x28] sm:$0xff]
        %v278 = vld [vmem:[%s2 + $0x30] sm:$0xff]
        %v279 = vld [vmem:[%s2 + $0x38] sm:$0xff]
        %281 = vset.pattern.permute.xlu0 0
        %282 = vperm.xlu0 %281, %v272
        %v283 = vpop.permute.xlu0 %282
        %286 = vset.pattern.permute.xlu0 0
        %287 = vperm.xlu0 %286, %v273
        %v288 = vpop.permute.xlu0 %287
        %291 = vset.pattern.permute.xlu0 0
        %292 = vperm.xlu0 %291, %v274
        %v293 = vpop.permute.xlu0 %292
        %296 = vset.pattern.permute.xlu0 0
        %297 = vperm.xlu0 %296, %v275
        %v298 = vpop.permute.xlu0 %297
        %301 = vset.pattern.permute.xlu0 0
        %302 = vperm.xlu0 %301, %v276
        %v303 = vpop.permute.xlu0 %302
        %306 = vset.pattern.permute.xlu0 0
        %307 = vperm.xlu0 %306, %v277
        %v308 = vpop.permute.xlu0 %307
        %311 = vset.pattern.permute.xlu0 0
        %312 = vperm.xlu0 %311, %v278
        %v313 = vpop.permute.xlu0 %312
        %316 = vset.pattern.permute.xlu0 0
        %317 = vperm.xlu0 %316, %v279
        %v318 = vpop.permute.xlu0 %317
        %vm320 = vcmask 293888
        %v322 = vsel %vm320, %v254, 0
        %v325 = vsel %vm320, %v255, 0
        %v328 = vsel %vm320, %v256, 0
        %v331 = vsel %vm320, %v257, 0
        %v334 = vsel %vm320, %v258, 0
        %v337 = vsel %vm320, %v259, 0
        %v340 = vsel %vm320, %v260, 0
        %v343 = vsel %vm320, %v261, 0
        %vm345 = vcmask 1043456
        %v347 = vsel %vm345, %v270, 0
        %v350 = vsel %vm345, %v271, 0
        %352 = vmatprep.subr.mxu0 %v263
        %353 = vmatpush1.msra.mxu0 %v262
        %354 = vmatprep.subr.mxu0 %v265
        %355 = vmatpush1.msra.mxu0 %v264
        %356 = vmatprep.subr.mxu0 %v267
        %357 = vmatpush1.msra.mxu0 %v266
        %358 = vmatprep.subr.mxu0 %v269
        %359 = vmatpush1.msra.mxu0 %v268
        %360 = vmatprep.subr.mxu0 %v350
        %361 = vmatpush1.msra.mxu0 %v347
        %362 = vmatprep.subr.mxu0 0.0
        %363 = vmatpush1.msra.mxu0 0.0
        %364 = vmatprep.subr.mxu0 0.0
        %365 = vmatpush1.msra.mxu0 0.0
        %366 = vmatprep.subr.mxu0 0.0
        %367 = vmatpush1.msra.mxu0 0.0
        %368 = vmatprep.subr.mxu0 0.0
        %369 = vmatpush1.msra.mxu0 0.0
        %370 = vmatprep.subr.mxu0 0.0
        %371 = vmatpush1.msra.mxu0 0.0
        %372 = vmatprep.subr.mxu0 0.0
        %373 = vmatpush1.msra.mxu0 0.0
        %374 = vmatprep.subr.mxu0 0.0
        %375 = vmatpush1.msra.mxu0 0.0
        %376 = vmatprep.subr.mxu0 0.0
        %377 = vmatpush1.msra.mxu0 0.0
        %378 = vmatprep.subr.mxu0 0.0
        %379 = vmatpush1.msra.mxu0 0.0
        %380 = vmatprep.subr.mxu0 0.0
        %381 = vmatpush1.msra.mxu0 0.0
        %382 = vmatprep.subr.mxu0 0.0
        %383 = vmatpush1.msra.mxu0 0.0
        %384 = vmatprep.subr.mxu0 0.0
        %385 = vmatpush1.msra.mxu0 0.0
        %386 = vmatprep.subr.mxu0 0.0
        %387 = vmatpush1.msra.mxu0 0.0
        %388 = vmatprep.subr.mxu0 0.0
        %389 = vmatpush1.msra.mxu0 0.0
        %390 = vmatprep.subr.mxu0 0.0
        %391 = vmatpush1.msra.mxu0 0.0
        %392 = vmatprep.subr.mxu0 0.0
        %393 = vmatpush1.msra.mxu0 0.0
        %394 = vmatprep.subr.mxu0 0.0
        %395 = vmatpush1.msra.mxu0 0.0
        %396 = vmatprep.subr.mxu0 0.0
        %397 = vmatpush1.msra.mxu0 0.0
        %398 = vmatprep.subr.mxu0 0.0
        %399 = vmatpush1.msra.mxu0 0.0
        %400 = vmatprep.subr.mxu0 0.0
        %401 = vmatpush1.msra.mxu0 0.0
        %402 = vmatprep.subr.mxu0 0.0
        %403 = vmatpush1.msra.mxu0 0.0
        %404 = vmatprep.subr.mxu0 0.0
        %405 = vmatpush1.msra.mxu0 0.0
        %406 = vmatprep.subr.mxu0 0.0
        %407 = vmatpush1.msra.mxu0 0.0
        %408 = vmatprep.subr.mxu0 0.0
        %409 = vmatpush1.msra.mxu0 0.0
        %410 = vmatprep.subr.mxu0 0.0
        %411 = vmatpush1.msra.mxu0 0.0
        %412 = vmatprep.subr.mxu0 0.0
        %413 = vmatpush1.msra.mxu0 0.0
        %414 = vmatprep.subr.mxu0 0.0
        %415 = vmatpush1.msra.mxu0 0.0
        %416 = vmatprep.mubr.f32.mxu0 0.0
        %417 = vmatmul.mubr.f32.gmra.mrb[0].mxu0 %v322
        %v418 = vpop.f32.mrb[0].mxu0
        %v419 = vadd.f32 %v283, %v418
        %v420 = vpop.f32.mrb[0].mxu0
        %v421 = vadd.f32 %v283, %v420
        %422 = vmatprep.mubr.f32.mxu0 0.0
        %423 = vmatmul.mubr.f32.gmra.mrb[0].mxu0 %v325
        %v424 = vpop.f32.mrb[0].mxu0
        %v425 = vadd.f32 %v288, %v424
        %v426 = vpop.f32.mrb[0].mxu0
        %v427 = vadd.f32 %v288, %v426
        %428 = vmatprep.mubr.f32.mxu0 0.0
        %429 = vmatmul.mubr.f32.gmra.mrb[0].mxu0 %v328
        %v430 = vpop.f32.mrb[0].mxu0
        %v431 = vadd.f32 %v293, %v430
        %v432 = vpop.f32.mrb[0].mxu0
        %v433 = vadd.f32 %v293, %v432
        %434 = vmatprep.mubr.f32.mxu0 0.0
        %435 = vmatmul.mubr.f32.gmra.mrb[0].mxu0 %v331
        %v436 = vpop.f32.mrb[0].mxu0
        %v437 = vadd.f32 %v298, %v436
        %v438 = vpop.f32.mrb[0].mxu0
        %v439 = vadd.f32 %v298, %v438
        %440 = vmatprep.mubr.f32.mxu0 0.0
        %441 = vmatmul.mubr.f32.gmra.mrb[0].mxu0 %v334
        %v442 = vpop.f32.mrb[0].mxu0
        %v443 = vadd.f32 %v303, %v442
        %v444 = vpop.f32.mrb[0].mxu0
        %v445 = vadd.f32 %v303, %v444
        %446 = vmatprep.mubr.f32.mxu0 0.0
        %447 = vmatmul.mubr.f32.gmra.mrb[0].mxu0 %v337
        %v448 = vpop.f32.mrb[0].mxu0
        %v449 = vadd.f32 %v308, %v448
        %v450 = vpop.f32.mrb[0].mxu0
        %v451 = vadd.f32 %v308, %v450
        %452 = vmatprep.mubr.f32.mxu0 0.0
        %453 = vmatmul.mubr.f32.gmra.mrb[0].mxu0 %v340
        %v454 = vpop.f32.mrb[0].mxu0
        %v455 = vadd.f32 %v313, %v454
        %v456 = vpop.f32.mrb[0].mxu0
        %v457 = vadd.f32 %v313, %v456
        %458 = vmatprep.mubr.f32.mxu0 0.0
        %459 = vmatmul.mubr.f32.gmra.mrb[0].mxu0 %v343
        %v460 = vpop.f32.mrb[0].mxu0
        %v461 = vadd.f32 %v318, %v460
        %v462 = vpop.f32.mrb[0].mxu0
        %v463 = vadd.f32 %v318, %v462
        %464 = vdwg.mxu0
        %v465 = vmax.f32 %v419, 0.0
        %v466 = vmax.f32 %v421, 0.0
        %v467 = vmax.f32 %v425, 0.0
        %v468 = vmax.f32 %v427, 0.0
        %v469 = vmax.f32 %v431, 0.0
        %v470 = vmax.f32 %v433, 0.0
        %v471 = vmax.f32 %v437, 0.0
        %v472 = vmax.f32 %v439, 0.0
        %v473 = vmax.f32 %v443, 0.0
        %v474 = vmax.f32 %v445, 0.0
        %v475 = vmax.f32 %v449, 0.0
        %v476 = vmax.f32 %v451, 0.0
        %v477 = vmax.f32 %v455, 0.0
        %v478 = vmax.f32 %v457, 0.0
        %v479 = vmax.f32 %v461, 0.0
        %v480 = vmax.f32 %v463, 0.0
        %v481 = vld [vmem:[%s3] sm:$0xf]
        %v482 = vld [vmem:[%s4] sm:$0xf]
        %484 = vset.pattern.permute.xlu0 0
        %485 = vperm.xlu0 %484, %v482
        %v486 = vpop.permute.xlu0 %485
        %vm488 = vcmask 523264
        %v490 = vsel %vm488, %v481, 0
        %492 = vmatprep.subr.mxu0 %v466
        %493 = vmatpush1.msra.mxu0 %v465
        %494 = vmatprep.subr.mxu0 %v468
        %495 = vmatpush1.msra.mxu0 %v467
        %496 = vmatprep.subr.mxu0 %v470
        %497 = vmatpush1.msra.mxu0 %v469
        %498 = vmatprep.subr.mxu0 %v472
        %499 = vmatpush1.msra.mxu0 %v471
        %500 = vmatprep.subr.mxu0 %v474
        %501 = vmatpush1.msra.mxu0 %v473
        %502 = vmatprep.subr.mxu0 %v476
        %503 = vmatpush1.msra.mxu0 %v475
        %504 = vmatprep.subr.mxu0 %v478
        %505 = vmatpush1.msra.mxu0 %v477
        %506 = vmatprep.subr.mxu0 %v480
        %507 = vmatpush1.msra.mxu0 %v479
        %508 = vmatprep.subr.mxu0 0.0
        %509 = vmatpush1.msra.mxu0 0.0
        %510 = vmatprep.subr.mxu0 0.0
        %511 = vmatpush1.msra.mxu0 0.0
        %512 = vmatprep.subr.mxu0 0.0
        %513 = vmatpush1.msra.mxu0 0.0
        %514 = vmatprep.subr.mxu0 0.0
        %515 = vmatpush1.msra.mxu0 0.0
        %516 = vmatprep.subr.mxu0 0.0
        %517 = vmatpush1.msra.mxu0 0.0
        %518 = vmatprep.subr.mxu0 0.0
        %519 = vmatpush1.msra.mxu0 0.0
        %520 = vmatprep.subr.mxu0 0.0
        %521 = vmatpush1.msra.mxu0 0.0
        %522 = vmatprep.subr.mxu0 0.0
        %523 = vmatpush1.msra.mxu0 0.0
        %524 = vmatprep.subr.mxu0 0.0
        %525 = vmatpush1.msra.mxu0 0.0
        %526 = vmatprep.subr.mxu0 0.0
        %527 = vmatpush1.msra.mxu0 0.0
        %528 = vmatprep.subr.mxu0 0.0
        %529 = vmatpush1.msra.mxu0 0.0
        %530 = vmatprep.subr.mxu0 0.0
        %531 = vmatpush1.msra.mxu0 0.0
        %532 = vmatprep.subr.mxu0 0.0
        %533 = vmatpush1.msra.mxu0 0.0
        %534 = vmatprep.subr.mxu0 0.0
        %535 = vmatpush1.msra.mxu0 0.0
        %536 = vmatprep.subr.mxu0 0.0
        %537 = vmatpush1.msra.mxu0 0.0
        %538 = vmatprep.subr.mxu0 0.0
        %539 = vmatpush1.msra.mxu0 0.0
        %540 = vmatprep.subr.mxu0 0.0
        %541 = vmatpush1.msra.mxu0 0.0
        %542 = vmatprep.subr.mxu0 0.0
        %543 = vmatpush1.msra.mxu0 0.0
        %544 = vmatprep.subr.mxu0 0.0
        %545 = vmatpush1.msra.mxu0 0.0
        %546 = vmatprep.subr.mxu0 0.0
        %547 = vmatpush1.msra.mxu0 0.0
        %548 = vmatprep.subr.mxu0 0.0
        %549 = vmatpush1.msra.mxu0 0.0
        %550 = vmatprep.subr.mxu0 0.0
        %551 = vmatpush1.msra.mxu0 0.0
        %552 = vmatprep.subr.mxu0 0.0
        %553 = vmatpush1.msra.mxu0 0.0
        %554 = vmatprep.subr.mxu0 0.0
        %555 = vmatpush1.msra.mxu0 0.0
        %556 = vmatprep.mubr.f32.mxu0 0.0
        %557 = vmatmul.mubr.f32.gmra.mrb[0].mxu0 %v490
        %v558 = vpop.f32.mrb[0].mxu0
        %v559 = vadd.f32 %v486, %v558
        %v560 = vpop.f32.mrb[0].mxu0
        %v561 = vadd.f32 %v486, %v560
        %562 = vdwg.mxu0
        %v565 = vcombine.low %v559, %v561
        %567 = vst [vmem:[%s242] sm:$0xff] %v565
        %s568 = sand.u32 %s153, 1
        %s569 = scalar_lea.sflag [#allocation3], %s568
        %s570 = sand.u32 %s153, 1
        %s571 = smul.addr %s570, 8
        %s572 = scalar_lea.vmem [#allocation2], %s571
        // Predicated region
        $region41: #{tpu_custom_call.1} parent=39 // pred_check
          %p573 = pneg %p163
        $region42: #{tpu_custom_call.1} parent=39 // pred_check_branch
          %575 = sbr.rel (%p573) target = $region44
        $region43: #{tpu_custom_call.1} parent=39 // pred_region
          %s576 = smul.u32 2, %s24
          %s578 = ssub.s32 128, 128
          %579 = vsyncadd %s569, %s578
          %s580 = smul.addr %s23, 2
          %s581 = sadd.s32 %s576, %s580
          %s582 = smul.addr %s581, 64
          %s583 = scalar_lea.hbm %s5, %s582
          %s585 = sshll.u32 %s572, 4
          %s586 = int_to_ptr.vmem [resolvable:$true] %s585
          %588 = dma.vmem_to_hbm [thread:$0]  %s586, 128, %s583, %s569
        $region44: #{tpu_custom_call.1} parent=39 // pred_fallthru
          _
      $region40: #{tpu_custom_call.1} parent=5 // pred_fallthru
        _
      %p589 = scmp.le.s32.totalorder 2, %s14
      // Predicated region
      $region45: #{tpu_custom_call.1} parent=5 // pred_check
        %p590 = pneg %p589
      $region46: #{tpu_custom_call.1} parent=5 // pred_check_branch
        %592 = sbr.rel (%p590) target = $region48
      $region47: #{tpu_custom_call.1} parent=5 // pred_region
        %s593 = ssub.s32 %s14, 2
        // Predicated region
        $region49: #{tpu_custom_call.1} parent=47 // pred_check
          %p594 = pneg %p169
        $region50: #{tpu_custom_call.1} parent=47 // pred_check_branch
          %596 = sbr.rel (%p594) target = $region52
        $region51: #{tpu_custom_call.1} parent=47 // pred_region
          %s597 = sand.u32 %s154, 1
          %s598 = scalar_lea.sflag [#allocation3], %s597
          %s599 = sand.u32 %s154, 1
          %s600 = smul.addr %s599, 8
          %s601 = scalar_lea.vmem [#allocation2], %s600
          %602 = dma.done %s598, 128
        $region52: #{tpu_custom_call.1} parent=47 // pred_fallthru
          _
      $region48: #{tpu_custom_call.1} parent=5 // pred_fallthru
        _
    $region6: #{tpu_custom_call.1} parent=1 // loop_footer
      %s18 = sadd.s32 1, %s14
    $region7: #{tpu_custom_call.1} parent=1 // loop_footer_branch
      %13 = sbr.rel target = $region3
    $region8: #{tpu_custom_call.1} parent=1 // loop_exit
      _
    %603 = vsyncpa [#allocation3], 1
    %s604 = scalar_lea.sflag [#allocation3], 1
    %605 = vsyncpa %s604, 1

</llo_original>
